<compile_context>
chip_gen: v7x
topology: tpu7x:2x2x1
jax: 0.10.0
libtpu: 0.0.40
codegen_flags: <defaults>
</compile_context>

<pallas_src>
import math
from functools import partial

import jax
import jax.numpy as jnp
from jax import lax
from jax.experimental import pallas as pl
from jax.experimental.pallas import tpu as pltpu


# ----------------------------- Pallas kernel -------------------------------

def _multitype_embedding_kernel(xfeat_ref,   # [TILE, K_cont]   bf16  [value | temporal-mean] features
                                xcat_ref,    # [TILE, n_cat]    int32 categorical indices
                                pe_ref,      # [TILE, D]        f32   positional encoding + fused bias (resident)
                                wcont_ref,   # [K_cont, D]      bf16  [w_val ; w_temp] (resident)
                                wcat_ref,    # [n_cat*vocab, D] bf16  concatenated embedding tables (resident)
                                out_ref):    # [TILE, D]        bf16
    # continuous path: single fused MXU matmul (value + temporal projections)
    cont = jnp.dot(xfeat_ref[...], wcont_ref[...],
                   preferred_element_type=jnp.float32)

    # categorical path: rebuild one-hot in-kernel from int32 indices, one MXU matmul
    # against the fused tables.  (Out-of-range indices -> all-zero row -> dropped.)
    idx = xcat_ref[...]                                     # [TILE, n_cat]
    tile, n_cat = idx.shape
    kc = wcat_ref.shape[0]
    vocab = kc // n_cat
    iota = lax.broadcasted_iota(jnp.int32, (tile, kc), 1)   # flat column ids
    hot = None
    for k in range(n_cat):                                  # n_cat is small & static
        hk = iota == (idx[:, k:k + 1] + k * vocab)
        hot = hk if hot is None else jnp.logical_or(hot, hk)
    onehot = hot.astype(wcat_ref.dtype)
    cat = jnp.dot(onehot, wcat_ref[...], preferred_element_type=jnp.float32)

    # epilogue: f32 accumulate, cast only at the store (bf16 output stream)
    out_ref[...] = (cont + cat + pe_ref[...]).astype(out_ref.dtype)


# ------------------------------ host helpers --------------------------------

def _sinusoidal_pe(T, D, dtype=jnp.float32):
    pos = jnp.arange(T, dtype=jnp.float32)[:, None]                  # [T, 1]
    i = jnp.arange(0, D, 2, dtype=jnp.float32)[None, :]              # [1, D/2]
    div = jnp.exp(-math.log(10000.0) * i / D)
    pe = jnp.zeros((T, D), dtype=jnp.float32)
    pe = pe.at[:, 0::2].set(jnp.sin(pos * div))
    pe = pe.at[:, 1::2].set(jnp.cos(pos * div))
    return pe.astype(dtype)


def _choose_tile_rows(NT, T, target):
    """Row tile: a multiple of lcm(T, 8), roughly `target` rows, and small enough
    that the 1-D grid has length >= 2 when there is enough work (v7x: 2 TCs)."""
    base = math.lcm(T, 8)
    total_reps = -(-NT // base)                 # base-chunks covering all rows
    max_reps = max(1, target // base)
    if total_reps >= 2:
        max_reps = min(max_reps, max(1, total_reps // 2))
    return base * min(max_reps, total_reps)


def _vmem_limit_bytes(tile_rows, k_cont, n_cat, k_cat, D, act_bytes, out_bytes):
    """Rough per-tile VMEM footprint (double-buffered streams + resident blocks +
    scratch), with 2x headroom, clamped well below v7x's 64 MiB per-core budget."""
    pad_lane = lambda n: -(-n // 128) * 128
    pad_sub = lambda n: -(-n // 8) * 8
    streamed = 2 * tile_rows * (pad_lane(k_cont) * act_bytes     # xfeat
                                + pad_lane(n_cat) * 4            # xcat (lane-padded)
                                + D * out_bytes)                 # output
    resident = 2 * (tile_rows * D * 4                            # pe (+bias)
                    + pad_sub(k_cont) * D * act_bytes            # w_cont
                    + pad_sub(k_cat) * D * act_bytes)            # w_cat
    scratch = tile_rows * (pad_lane(k_cat) * act_bytes + 2 * D * 4)   # onehot + f32 partials
    est = 2 * (streamed + resident + scratch)
    return int(min(max(est, 16 * 1024 * 1024), 48 * 1024 * 1024))


# ------------------------------ host wrapper --------------------------------

@partial(jax.jit, static_argnames=("tile_target", "out_dtype"))
def multitype_embedding_forward(x_cont, x_mark, x_cat, params,
                                tile_target=2048, out_dtype=jnp.bfloat16):
    """
    x_cont : [N, T, M, C_in]   float32  continuous covariates (price, quantity, ...)
    x_mark : [N, T, M, C_time] float32  continuous timestamp features
    x_cat  : [N, T, n_cat]     int32    categorical timestamp indices
    returns: [N, T, D]         out_dtype (default bfloat16)  embedded_data
    """
    N, T, M, C_in = x_cont.shape
    C_time = x_mark.shape[-1]
    n_cat = x_cat.shape[-1]
    if n_cat < 1:
        raise NotImplementedError("continuous-only path (n_cat == 0) not implemented")
    D = params["w_val"].shape[-1]
    vocab = params["cat_tables"].shape[1]
    NT = N * T

    compute_dtype = jnp.bfloat16

    # ---- host-side glue (cheap): flatten, temporal mean, feature fusion, casts
    xval = x_cont.reshape(NT, M * C_in)
    xmark_mean = x_mark.mean(axis=2).reshape(NT, C_time)
    xfeat = jnp.concatenate([xval, xmark_mean], axis=-1).astype(compute_dtype)

    xcat = x_cat.reshape(NT, n_cat).astype(jnp.int32)

    w_cont = jnp.concatenate(
        [params["w_val"], params["w_temp"]], axis=0).astype(compute_dtype)
    w_cat = params["cat_tables"].reshape(n_cat * vocab, D).astype(compute_dtype)
    bias = (params["b_val"] + params["b_temp"]).reshape(1, D).astype(jnp.float32)

    # ---- tiling: big row tiles over the UNPADDED NT (ragged last block is masked
    # by Pallas, so there is no padded-output slice copy).
    tile_rows = _choose_tile_rows(NT, T, tile_target)
    grid = (pl.cdiv(NT, tile_rows),)

    # positional encoding + fused bias: one [tile_rows, D] block, VMEM-resident
    # (constant index_map).  tile_rows % T == 0, so row j of any tile has time j % T.
    pe_tile = jnp.tile(_sinusoidal_pe(T, D), (tile_rows // T, 1)) + bias

    k_cont = M * C_in + C_time
    k_cat = n_cat * vocab

    act_bytes = jnp.dtype(compute_dtype).itemsize
    out_bytes = jnp.dtype(out_dtype).itemsize
    bytes_accessed = (NT * k_cont * act_bytes            # fused continuous features
                      + NT * n_cat * 4                   # int32 categorical indices
                      + tile_rows * D * 4                # resident positional block
                      + (k_cont + k_cat) * D * act_bytes # resident weights/tables
                      + NT * D * out_bytes)              # output (bf16 by default)
    cost = pl.CostEstimate(flops=2 * NT * (k_cont + k_cat) * D,
                           transcendentals=0,
                           bytes_accessed=bytes_accessed)

    out = pl.pallas_call(
        _multitype_embedding_kernel,
        out_shape=jax.ShapeDtypeStruct((NT, D), out_dtype),
        grid=grid,
        in_specs=[
            pl.BlockSpec((tile_rows, k_cont), lambda i: (i, 0)),
            pl.BlockSpec((tile_rows, n_cat), lambda i: (i, 0)),
            pl.BlockSpec((tile_rows, D), lambda i: (0, 0)),      # pe(+bias): resident
            pl.BlockSpec((k_cont, D), lambda i: (0, 0)),         # weights: resident
            pl.BlockSpec((k_cat, D), lambda i: (0, 0)),          # tables: resident
        ],
        out_specs=pl.BlockSpec((tile_rows, D), lambda i: (i, 0)),
        compiler_params=pltpu.CompilerParams(
            dimension_semantics=("parallel",),
            vmem_limit_bytes=_vmem_limit_bytes(tile_rows, k_cont, n_cat, k_cat, D,
                                               act_bytes, out_bytes)),
        cost_estimate=cost,
    )(xfeat, xcat, pe_tile, w_cont, w_cat)

    return out.reshape(N, T, D)


# ------------------------------ reference (plain JAX, f32) -------------------

def multitype_embedding_reference(x_cont, x_mark, x_cat, params):
    N, T, M, C_in = x_cont.shape
    n_cat = x_cat.shape[-1]
    D = params["w_val"].shape[-1]

    value = x_cont.reshape(N, T, M * C_in) @ params["w_val"] + params["b_val"]
    temporal = x_mark.mean(axis=2) @ params["w_temp"] + params["b_temp"]
    pos = _sinusoidal_pe(T, D)[None, :, :]
    cont = value + temporal + pos

    cat = jnp.zeros((N, T, D), jnp.float32)
    for k in range(n_cat):
        cat = cat + params["cat_tables"][k][x_cat[..., k]]
    return cont + cat


# ----------------------------------- main ------------------------------------

if __name__ == "__main__":
    # small shapes consistent with the module's [N, T, M, C] -> [N, T, C] contract;
    # d_model = 128 keeps the kernel output lane-dense (unmasked vector stores).
    N, T, M = 2, 8, 4
    C_in, C_time = 4, 5
    D = 128          # d_model (output C)
    n_cat, vocab = 3, 8

    key = jax.random.PRNGKey(0)
    k_cont, k_mark, k_cat, k_wv, k_wt, k_tab = jax.random.split(key, 6)

    x_cont = jax.random.normal(k_cont, (N, T, M, C_in), dtype=jnp.float32)
    x_mark = jax.random.normal(k_mark, (N, T, M, C_time), dtype=jnp.float32)
    x_cat = jax.random.randint(k_cat, (N, T, n_cat), 0, vocab, dtype=jnp.int32)

    # deterministic synthetic parameters (no checkpoint load)
    params = {
        "w_val": jax.random.normal(k_wv, (M * C_in, D), dtype=jnp.float32) * 0.1,
        "b_val": jnp.zeros((D,), jnp.float32),
        "w_temp": jax.random.normal(k_wt, (C_time, D), dtype=jnp.float32) * 0.1,
        "b_temp": jnp.zeros((D,), jnp.float32),
        "cat_tables": jax.random.normal(k_tab, (n_cat, vocab, D), dtype=jnp.float32) * 0.1,
    }

    out = multitype_embedding_forward(x_cont, x_mark, x_cat, params)
    out = jax.block_until_ready(out)

    ref = multitype_embedding_reference(x_cont, x_mark, x_cat, params)
    assert out.shape == (N, T, D)
    # bf16-streamed activations/weights + bf16 output store vs f32 reference
    assert jnp.allclose(out.astype(jnp.float32), ref, atol=5e-2, rtol=5e-2), \
        "mismatch vs reference"

    print("KERNEL_OK")
</pallas_src>

<mosaic_0001>
module attributes {stable_mosaic.version = 11 : i64} {
  func.func @_multitype_embedding_kernel(%arg0: i32, %arg1: memref<8x21xbf16, #tpu.memory_space<vmem>>, %arg2: memref<8x3xi32, #tpu.memory_space<vmem>>, %arg3: memref<8x128xf32, #tpu.memory_space<vmem>>, %arg4: memref<21x128xbf16, #tpu.memory_space<vmem>>, %arg5: memref<24x128xbf16, #tpu.memory_space<vmem>>, %arg6: memref<8x128xbf16, #tpu.memory_space<vmem>>) attributes {dimension_semantics = [#tpu.dimension_semantics<parallel>], iteration_bounds = array<i64: 2>, scalar_prefetch = 0 : i64, scratch_operands = 0 : i64, tpu.core_type = #tpu.core_type<tc>, window_params = [{transform_indices = @transform_0, window_bounds = array<i64: 8, 21>}, {transform_indices = @transform_1, window_bounds = array<i64: 8, 3>}, {pipeline_mode = #tpu.pipeline_mode<synchronous>, transform_indices = @transform_2, window_bounds = array<i64: 8, 128>}, {pipeline_mode = #tpu.pipeline_mode<synchronous>, transform_indices = @transform_3, window_bounds = array<i64: 21, 128>}, {pipeline_mode = #tpu.pipeline_mode<synchronous>, transform_indices = @transform_4, window_bounds = array<i64: 24, 128>}, {transform_indices = @transform_5, window_bounds = array<i64: 8, 128>}]} {
    %c0 = arith.constant 0 : index
    %c0_0 = arith.constant 0 : index
    %0 = vector.load %arg1[%c0, %c0_0] : memref<8x21xbf16, #tpu.memory_space<vmem>>, vector<8x21xbf16>
    %c0_1 = arith.constant 0 : index
    %c0_2 = arith.constant 0 : index
    %1 = vector.load %arg4[%c0_1, %c0_2] : memref<21x128xbf16, #tpu.memory_space<vmem>>, vector<21x128xbf16>
    %cst = arith.constant dense<0.000000e+00> : vector<8x128xf32>
    %2 = tpu.matmul %0, %1, %cst {dimension_numbers = #tpu.dot_dimension_numbers<[1], [0], [0], [1], [0, 0, 1, 1], [], []>} : vector<8x21xbf16>, vector<21x128xbf16>, vector<8x128xf32> -> vector<8x128xf32>
    %c0_3 = arith.constant 0 : index
    %c0_4 = arith.constant 0 : index
    %3 = vector.load %arg2[%c0_3, %c0_4] : memref<8x3xi32, #tpu.memory_space<vmem>>, vector<8x3xi32>
    %4 = tpu.iota {dimensions = array<i32: 1>} : vector<8x24xi32>
    %5 = vector.extract_strided_slice %3 {offsets = [0, 0], sizes = [8, 1], strides = [1, 1]} : vector<8x3xi32> to vector<8x1xi32>
    %c0_i32 = arith.constant 0 : i32
    %6 = vector.broadcast %c0_i32 : i32 to vector<8x1xi32>
    %7 = arith.addi %5, %6 : vector<8x1xi32>
    %8 = vector.broadcast %7 : vector<8x1xi32> to vector<8x24xi32>
    %9 = arith.cmpi eq, %4, %8 : vector<8x24xi32>
    %10 = vector.extract_strided_slice %3 {offsets = [0, 1], sizes = [8, 1], strides = [1, 1]} : vector<8x3xi32> to vector<8x1xi32>
    %c8_i32 = arith.constant 8 : i32
    %11 = vector.broadcast %c8_i32 : i32 to vector<8x1xi32>
    %12 = arith.addi %10, %11 : vector<8x1xi32>
    %13 = vector.broadcast %12 : vector<8x1xi32> to vector<8x24xi32>
    %14 = arith.cmpi eq, %4, %13 : vector<8x24xi32>
    %15 = arith.ori %9, %14 : vector<8x24xi1>
    %16 = vector.extract_strided_slice %3 {offsets = [0, 2], sizes = [8, 1], strides = [1, 1]} : vector<8x3xi32> to vector<8x1xi32>
    %c16_i32 = arith.constant 16 : i32
    %17 = vector.broadcast %c16_i32 : i32 to vector<8x1xi32>
    %18 = arith.addi %16, %17 : vector<8x1xi32>
    %19 = vector.broadcast %18 : vector<8x1xi32> to vector<8x24xi32>
    %20 = arith.cmpi eq, %4, %19 : vector<8x24xi32>
    %21 = arith.ori %15, %20 : vector<8x24xi1>
    %22 = arith.extui %21 : vector<8x24xi1> to vector<8x24xi32>
    %23 = arith.sitofp %22 : vector<8x24xi32> to vector<8x24xf32>
    %24 = arith.truncf %23 : vector<8x24xf32> to vector<8x24xbf16>
    %c0_5 = arith.constant 0 : index
    %c0_6 = arith.constant 0 : index
    %25 = vector.load %arg5[%c0_5, %c0_6] : memref<24x128xbf16, #tpu.memory_space<vmem>>, vector<24x128xbf16>
    %cst_7 = arith.constant dense<0.000000e+00> : vector<8x128xf32>
    %26 = tpu.matmul %24, %25, %cst_7 {dimension_numbers = #tpu.dot_dimension_numbers<[1], [0], [0], [1], [0, 0, 1, 1], [], []>} : vector<8x24xbf16>, vector<24x128xbf16>, vector<8x128xf32> -> vector<8x128xf32>
    %27 = arith.addf %2, %26 : vector<8x128xf32>
    %c0_8 = arith.constant 0 : index
    %c0_9 = arith.constant 0 : index
    %28 = vector.load %arg3[%c0_8, %c0_9] : memref<8x128xf32, #tpu.memory_space<vmem>>, vector<8x128xf32>
    %29 = arith.addf %27, %28 : vector<8x128xf32>
    %30 = arith.truncf %29 : vector<8x128xf32> to vector<8x128xbf16>
    %c0_10 = arith.constant 0 : index
    %c0_11 = arith.constant 0 : index
    %31 = vector.load %arg6[%c0_10, %c0_11] : memref<8x128xbf16, #tpu.memory_space<vmem>>, vector<8x128xbf16>
    tpu.vector_store %arg6[%c0_10, %c0_11], %30 {strides = array<i32>} : memref<8x128xbf16, #tpu.memory_space<vmem>>, vector<8x128xbf16>,
    return
  }
  func.func @transform_0(%arg0: i32) -> (i32, i32) {
    %c0_i32 = arith.constant 0 : i32
    %c0_i32_0 = arith.constant 0 : i32
    return %arg0, %c0_i32 : i32, i32
  }
  func.func @transform_1(%arg0: i32) -> (i32, i32) {
    %c0_i32 = arith.constant 0 : i32
    %c0_i32_0 = arith.constant 0 : i32
    return %arg0, %c0_i32 : i32, i32
  }
  func.func @transform_2(%arg0: i32) -> (i32, i32) {
    %c0_i32 = arith.constant 0 : i32
    %c0_i32_0 = arith.constant 0 : i32
    %c0_i32_1 = arith.constant 0 : i32
    return %c0_i32, %c0_i32_0 : i32, i32
  }
  func.func @transform_3(%arg0: i32) -> (i32, i32) {
    %c0_i32 = arith.constant 0 : i32
    %c0_i32_0 = arith.constant 0 : i32
    %c0_i32_1 = arith.constant 0 : i32
    return %c0_i32, %c0_i32_0 : i32, i32
  }
  func.func @transform_4(%arg0: i32) -> (i32, i32) {
    %c0_i32 = arith.constant 0 : i32
    %c0_i32_0 = arith.constant 0 : i32
    %c0_i32_1 = arith.constant 0 : i32
    return %c0_i32, %c0_i32_0 : i32, i32
  }
  func.func @transform_5(%arg0: i32) -> (i32, i32) {
    %c0_i32 = arith.constant 0 : i32
    %c0_i32_0 = arith.constant 0 : i32
    return %arg0, %c0_i32 : i32, i32
  }
}

</mosaic_0001>

<llo_original>
// kernel: multitype_embedding_forward.1
$region0: #{multitype_embedding_forward.1}
  #allocation0 [shape = 'u32[]', space=smem, size = 0x4, offset = 0x4, fixed_abs, tag = 'smem constant byte address 0x4 - core index']
  #allocation1 [shape = 'u32[144,128]{1,0:T(1,128)}', space=vmem, size = 0x12000, scoped, tag = 'internal scratch']
  %s0 = inlined_call_operand.vmem [shape: bf16[16,21], index: 0, kind: input, shape index: {}]
  %s1 = inlined_call_operand.vmem [shape: s32[16,3], index: 1, kind: input, shape index: {}]
  %s2 = inlined_call_operand.vmem [shape: f32[8,128], index: 2, kind: input, shape index: {}]
  %s3 = inlined_call_operand.vmem [shape: bf16[21,128], index: 3, kind: input, shape index: {}]
  %s4 = inlined_call_operand.vmem [shape: bf16[24,128], index: 4, kind: input, shape index: {}]
  %s5 = inlined_call_operand.hbm [shape: bf16[16,128], index: 5, kind: output, shape index: {}]
  %s6 = sld [smem:[#allocation0]]
  $region53: #{multitype_embedding_forward.1} parent=0
    _
  %s8 = ssub.s32 1, %s6
  %s9 = scalar_select 0, %s8, %s6
  $region1: #{multitype_embedding_forward.1} parent=0
    #allocation2 [shape = 'u8[4096]{0}', space=vmem, size = 0x1000, scoped, tag = 'output window, operand 0']
    #allocation3 [shape = 's32[2]{0}', space=sflag, size = 0x8, scoped, tag = 'scoped memory for multitype_embedding_forward.1']
    %10 = vsyncpa [#allocation3], 0
    %s11 = scalar_lea.sflag [#allocation3], 1
    %12 = vsyncpa %s11, 0
    loop: start=0, step=1, limit=4
    $region2: #{multitype_embedding_forward.1} parent=1 // loop_pre_header
      _
    $region3: #{multitype_embedding_forward.1} parent=1 // loop_header
      %s14 = sphi 0, %s18
      %p15 = scmp.ge.s32.totalorder %s14, 4
      %s24 = sphi 0, %s26
      %s27 = sphi 0, %s24
      %s28 = sphi 0, %s27
      %s44 = sphi 0, %s28
      %s50 = sphi 0, %s52
      %s53 = sphi 0, %s50
      %s54 = sphi 0, %s53
      %s70 = sphi 0, %s54
      %s74 = sphi 0, %s74
      %s76 = sphi 0, %s74
      %s77 = sphi 0, %s76
      %s91 = sphi 0, %s77
      %s95 = sphi 0, %s95
      %s97 = sphi 0, %s95
      %s98 = sphi 0, %s97
      %s112 = sphi 0, %s98
      %s116 = sphi 0, %s116
      %s118 = sphi 0, %s116
      %s119 = sphi 0, %s118
      %s133 = sphi 0, %s119
      %s139 = sphi 0, %s141
      %s142 = sphi 0, %s139
      %s143 = sphi 0, %s142
      %s159 = sphi 0, %s143
    $region4: #{multitype_embedding_forward.1} parent=1 // loop_header_branch
      %17 = sbr.rel (%p15) target = $region8
    $region5: #{multitype_embedding_forward.1} parent=1 // loop_body
      %s19 = ssub.s32 %s14, 1
      %s20 = ssub.s32 %s14, 2
      %s21 = sadd.s32 %s14, 1
      %s22 = ssub.s32 %s14, %s21
      %p23 = scmp.eq.s32.totalorder %s22, 0
      %s25 = sadd.s32 %s24, 1
      %s26 = scalar_select %p23, %s24, %s25
      %p29 = pneg %p23
      %p30 = scmp.eq.s32.totalorder %s14, 1
      %p31 = por %p29, %p30
      %p32 = scmp.ne.s32.totalorder %s24, %s27
      %p33 = scmp.eq.s32.totalorder %s14, 0
      %p34 = por %p32, %p33
      %p35 = scmp.ne.s32.totalorder %s24, %s27
      %p36 = scmp.eq.s32.totalorder %s19, 1
      %p37 = por %p35, %p36
      %p38 = scmp.ne.s32.totalorder %s27, %s28
      %p39 = scmp.eq.s32.totalorder %s19, 0
      %p40 = por %p38, %p39
      %p41 = scmp.ne.s32.totalorder %s27, %s28
      %p42 = scmp.eq.s32.totalorder %s20, 1
      %p43 = por %p41, %p42
      %p45 = scmp.ne.s32.totalorder %s28, %s44
      %p46 = scmp.eq.s32.totalorder %s20, 0
      %p47 = por %p45, %p46
      %s48 = ssub.s32 %s14, %s21
      %p49 = scmp.eq.s32.totalorder %s48, 0
      %s51 = sadd.s32 %s50, 1
      %s52 = scalar_select %p49, %s50, %s51
      %p55 = pneg %p49
      %p56 = scmp.eq.s32.totalorder %s14, 1
      %p57 = por %p55, %p56
      %p58 = scmp.ne.s32.totalorder %s50, %s53
      %p59 = scmp.eq.s32.totalorder %s14, 0
      %p60 = por %p58, %p59
      %p61 = scmp.ne.s32.totalorder %s50, %s53
      %p62 = scmp.eq.s32.totalorder %s19, 1
      %p63 = por %p61, %p62
      %p64 = scmp.ne.s32.totalorder %s53, %s54
      %p65 = scmp.eq.s32.totalorder %s19, 0
      %p66 = por %p64, %p65
      %p67 = scmp.ne.s32.totalorder %s53, %s54
      %p68 = scmp.eq.s32.totalorder %s20, 1
      %p69 = por %p67, %p68
      %p71 = scmp.ne.s32.totalorder %s54, %s70
      %p72 = scmp.eq.s32.totalorder %s20, 0
      %p73 = por %p71, %p72
      %s75 = sadd.s32 %s74, 1
      %p78 = scmp.eq.s32.totalorder %s14, 1
      %p79 = scmp.ne.s32.totalorder %s74, %s76
      %p80 = scmp.eq.s32.totalorder %s14, 0
      %p81 = por %p79, %p80
      %p82 = scmp.ne.s32.totalorder %s74, %s76
      %p83 = scmp.eq.s32.totalorder %s19, 1
      %p84 = por %p82, %p83
      %p85 = scmp.ne.s32.totalorder %s76, %s77
      %p86 = scmp.eq.s32.totalorder %s19, 0
      %p87 = por %p85, %p86
      %p88 = scmp.ne.s32.totalorder %s76, %s77
      %p89 = scmp.eq.s32.totalorder %s20, 1
      %p90 = por %p88, %p89
      %p92 = scmp.ne.s32.totalorder %s77, %s91
      %p93 = scmp.eq.s32.totalorder %s20, 0
      %p94 = por %p92, %p93
      %s96 = sadd.s32 %s95, 1
      %p99 = scmp.eq.s32.totalorder %s14, 1
      %p100 = scmp.ne.s32.totalorder %s95, %s97
      %p101 = scmp.eq.s32.totalorder %s14, 0
      %p102 = por %p100, %p101
      %p103 = scmp.ne.s32.totalorder %s95, %s97
      %p104 = scmp.eq.s32.totalorder %s19, 1
      %p105 = por %p103, %p104
      %p106 = scmp.ne.s32.totalorder %s97, %s98
      %p107 = scmp.eq.s32.totalorder %s19, 0
      %p108 = por %p106, %p107
      %p109 = scmp.ne.s32.totalorder %s97, %s98
      %p110 = scmp.eq.s32.totalorder %s20, 1
      %p111 = por %p109, %p110
      %p113 = scmp.ne.s32.totalorder %s98, %s112
      %p114 = scmp.eq.s32.totalorder %s20, 0
      %p115 = por %p113, %p114
      %s117 = sadd.s32 %s116, 1
      %p120 = scmp.eq.s32.totalorder %s14, 1
      %p121 = scmp.ne.s32.totalorder %s116, %s118
      %p122 = scmp.eq.s32.totalorder %s14, 0
      %p123 = por %p121, %p122
      %p124 = scmp.ne.s32.totalorder %s116, %s118
      %p125 = scmp.eq.s32.totalorder %s19, 1
      %p126 = por %p124, %p125
      %p127 = scmp.ne.s32.totalorder %s118, %s119
      %p128 = scmp.eq.s32.totalorder %s19, 0
      %p129 = por %p127, %p128
      %p130 = scmp.ne.s32.totalorder %s118, %s119
      %p131 = scmp.eq.s32.totalorder %s20, 1
      %p132 = por %p130, %p131
      %p134 = scmp.ne.s32.totalorder %s119, %s133
      %p135 = scmp.eq.s32.totalorder %s20, 0
      %p136 = por %p134, %p135
      %s137 = ssub.s32 %s14, %s21
      %p138 = scmp.eq.s32.totalorder %s137, 0
      %s140 = sadd.s32 %s139, 1
      %s141 = scalar_select %p138, %s139, %s140
      %p144 = pneg %p138
      %p145 = scmp.eq.s32.totalorder %s14, 1
      %p146 = por %p144, %p145
      %p147 = scmp.ne.s32.totalorder %s139, %s142
      %p148 = scmp.eq.s32.totalorder %s14, 0
      %p149 = por %p147, %p148
      %p150 = scmp.ne.s32.totalorder %s139, %s142
      %p151 = scmp.eq.s32.totalorder %s19, 1
      %p152 = por %p150, %p151
      %p153 = scmp.ne.s32.totalorder %s142, %s143
      %p154 = scmp.eq.s32.totalorder %s19, 0
      %p155 = por %p153, %p154
      %p156 = scmp.ne.s32.totalorder %s142, %s143
      %p157 = scmp.eq.s32.totalorder %s20, 1
      %p158 = por %p156, %p157
      %p160 = scmp.ne.s32.totalorder %s143, %s159
      %p161 = scmp.eq.s32.totalorder %s20, 0
      %p162 = por %p160, %p161
      %p163 = scmp.le.s32.totalorder 1, %s14
      %p164 = scmp.lt.s32.totalorder %s14, 3
      %p165 = pnand %p163, %p164
      %p166 = pneg %p165
      // Predicated region
      $region9: #{multitype_embedding_forward.1} parent=5 // pred_check
        _
      $region10: #{multitype_embedding_forward.1} parent=5 // pred_check_branch
        %168 = sbr.rel (%p165) target = $region12
      $region11: #{multitype_embedding_forward.1} parent=5 // pred_region
        %s169 = ssub.s32 %s14, 1
        // Predicated region
        $region13: #{multitype_embedding_forward.1} parent=11 // pred_check
          %p170 = pneg %p87
        $region14: #{multitype_embedding_forward.1} parent=11 // pred_check_branch
          %172 = sbr.rel (%p170) target = $region16
        $region15: #{multitype_embedding_forward.1} parent=11 // pred_region
          _
        $region16: #{multitype_embedding_forward.1} parent=11 // pred_fallthru
          _
        // Predicated region
        $region17: #{multitype_embedding_forward.1} parent=11 // pred_check
          %p173 = pneg %p108
        $region18: #{multitype_embedding_forward.1} parent=11 // pred_check_branch
          %175 = sbr.rel (%p173) target = $region20
        $region19: #{multitype_embedding_forward.1} parent=11 // pred_region
          _
        $region20: #{multitype_embedding_forward.1} parent=11 // pred_fallthru
          _
        // Predicated region
        $region21: #{multitype_embedding_forward.1} parent=11 // pred_check
          %p176 = pneg %p129
        $region22: #{multitype_embedding_forward.1} parent=11 // pred_check_branch
          %178 = sbr.rel (%p176) target = $region24
        $region23: #{multitype_embedding_forward.1} parent=11 // pred_region
          _
        $region24: #{multitype_embedding_forward.1} parent=11 // pred_fallthru
          _
      $region12: #{multitype_embedding_forward.1} parent=5 // pred_fallthru
        _
      %p179 = scmp.lt.s32.totalorder %s14, 2
      // Predicated region
      $region25: #{multitype_embedding_forward.1} parent=5 // pred_check
        %p180 = pneg %p179
      $region26: #{multitype_embedding_forward.1} parent=5 // pred_check_branch
        %182 = sbr.rel (%p180) target = $region28
      $region27: #{multitype_embedding_forward.1} parent=5 // pred_region
        // Predicated region
        $region29: #{multitype_embedding_forward.1} parent=27 // pred_check
          %p183 = pneg %p34
        $region30: #{multitype_embedding_forward.1} parent=27 // pred_check_branch
          %185 = sbr.rel (%p183) target = $region32
        $region31: #{multitype_embedding_forward.1} parent=27 // pred_region
          %p186 = scmp.lt.s32.totalorder %s14, 1
          %s187 = scalar_select %p186, %s14, 1
          %s188 = smul.addr %s187, 4
          %s189 = scalar_lea.vmem %s0, %s188
        $region32: #{multitype_embedding_forward.1} parent=27 // pred_fallthru
          _
        // Predicated region
        $region33: #{multitype_embedding_forward.1} parent=27 // pred_check
          %p190 = pneg %p60
        $region34: #{multitype_embedding_forward.1} parent=27 // pred_check_branch
          %192 = sbr.rel (%p190) target = $region36
        $region35: #{multitype_embedding_forward.1} parent=27 // pred_region
          %p193 = scmp.lt.s32.totalorder %s14, 1
          %s194 = scalar_select %p193, %s14, 1
          %s195 = smul.addr %s194, 8
          %s196 = scalar_lea.vmem %s1, %s195
        $region36: #{multitype_embedding_forward.1} parent=27 // pred_fallthru
          _
      $region28: #{multitype_embedding_forward.1} parent=5 // pred_fallthru
        _
      %p197 = scmp.le.s32.totalorder 1, %s14
      %p198 = scmp.lt.s32.totalorder %s14, 3
      %p199 = pnand %p197, %p198
      %p200 = pneg %p199
      // Predicated region
      $region37: #{multitype_embedding_forward.1} parent=5 // pred_check
        _
      $region38: #{multitype_embedding_forward.1} parent=5 // pred_check_branch
        %202 = sbr.rel (%p199) target = $region40
      $region39: #{multitype_embedding_forward.1} parent=5 // pred_region
        %s203 = ssub.s32 %s14, 1
        %p204 = scmp.lt.s32.totalorder %s19, 1
        %s205 = scalar_select %p204, %s19, 1
        %s206 = smul.addr %s205, 4
        %s207 = scalar_lea.vmem %s0, %s206
        %p208 = pneg %p40
        %p209 = pneg %p37
        %p210 = scmp.lt.s32.totalorder %s19, 1
        %s211 = scalar_select %p210, %s19, 1
        %s212 = smul.addr %s211, 8
        %s213 = scalar_lea.vmem %s1, %s212
        %p214 = pneg %p66
        %p215 = pneg %p63
        %p216 = pneg %p87
        %p217 = pneg %p84
        %p218 = pneg %p108
        %p219 = pneg %p105
        %p220 = pneg %p129
        %p221 = pneg %p126
        %p222 = pneg %p155
        %p223 = pneg %p152
        %s224 = sand.u32 %s142, 1
        %s225 = scalar_lea.sflag [#allocation3], %s224
        %s226 = sand.u32 %s142, 1
        %s227 = smul.addr %s226, 4
        %s228 = scalar_lea.vmem [#allocation2], %s227
        %p229 = scmp.lt.s32.totalorder %s19, 1
        %s230 = scalar_select %p229, %s19, 1
        %s231 = smul.addr %s230, 4
        %s232 = scalar_lea.vmem %s0, %s231
        %p233 = scmp.lt.s32.totalorder %s19, 1
        %s234 = scalar_select %p233, %s19, 1
        %s235 = smul.addr %s234, 8
        %s236 = scalar_lea.vmem %s1, %s235
        %v238 = vld [vmem:[%s232] sm:$0xf]
        %v239 = vld [vmem:[%s3] sm:$0xf]
        %v240 = vld [vmem:[%s3 + $0x4] sm:$0xf]
        %v241 = vld [vmem:[%s3 + $0x8] sm:$0x7]
        %v242 = vld [vmem:[%s236] sm:$0xff]
        %v243 = vlaneseq
        %v244 = vand.u32 %v243, 127
        %245 = vset.pattern.permute.xlu0 0
        %246 = vperm.xlu0 %245, %v242
        %v247 = vpop.permute.xlu0 %246
        %vm248 = vcmp.eq.s32.totalorder %v244, %v247
        %v249 = vadd.s32 %v242, 8
        %250 = vset.pattern.permute.xlu0 1
        %251 = vperm.xlu0 %250, %v249
        %v252 = vpop.permute.xlu0 %251
        %vm253 = vcmp.eq.s32.totalorder %v244, %v252
        %vm254 = vmor %vm248, %vm253
        %v255 = vadd.s32 %v242, 16
        %256 = vset.pattern.permute.xlu0 2
        %257 = vperm.xlu0 %256, %v255
        %v258 = vpop.permute.xlu0 %257
        %vm259 = vcmp.eq.s32.totalorder %v244, %v258
        %vm260 = vmor %vm254, %vm259
        %v261 = vsel %vm260, 1, 0
        %v262 = vcvt.s32.f32 %v261
        %v263 = vpack.c.bf16 %v262, %v262
        %v264 = vld [vmem:[%s4] sm:$0xf]
        %v265 = vld [vmem:[%s4 + $0x4] sm:$0xf]
        %v266 = vld [vmem:[%s4 + $0x8] sm:$0xf]
        %v270 = vunpack.c.l.b16 %v264
        %v271 = vunpack.c.l.b16 %v265
        %v272 = vunpack.c.l.b16 %v266
        %v273 = vpack.c.b16 %v271, %v270
        %v274 = vpack.c.b16 %v272, %v272
        %vm276 = vcmask 195584
        %v278 = vsel %vm276, %v263, 0
        %vm280 = vcmask 1043456
        %v282 = vsel %vm280, %v274, 0
        %284 = vmatprep.subr.bf16.mxu0 0
        %285 = vmatpush1.bf16.msra.mxu0 %v273
        %286 = vmatprep.subr.bf16.mxu0 0
        %287 = vmatpush1.bf16.msra.mxu0 %v282
        %288 = vmatprep.subr.bf16.mxu0 0
        %289 = vmatpush1.bf16.msra.mxu0 0
        %290 = vmatprep.subr.bf16.mxu0 0
        %291 = vmatpush1.bf16.msra.mxu0 0
        %292 = vmatprep.subr.bf16.mxu0 0
        %293 = vmatpush1.bf16.msra.mxu0 0
        %294 = vmatprep.subr.bf16.mxu0 0
        %295 = vmatpush1.bf16.msra.mxu0 0
        %296 = vmatprep.subr.bf16.mxu0 0
        %297 = vmatpush1.bf16.msra.mxu0 0
        %298 = vmatprep.subr.bf16.mxu0 0
        %299 = vmatpush1.bf16.msra.mxu0 0
        %300 = vmatprep.subr.bf16.mxu0 0
        %301 = vmatpush1.bf16.msra.mxu0 0
        %302 = vmatprep.subr.bf16.mxu0 0
        %303 = vmatpush1.bf16.msra.mxu0 0
        %304 = vmatprep.subr.bf16.mxu0 0
        %305 = vmatpush1.bf16.msra.mxu0 0
        %306 = vmatprep.subr.bf16.mxu0 0
        %307 = vmatpush1.bf16.msra.mxu0 0
        %308 = vmatprep.subr.bf16.mxu0 0
        %309 = vmatpush1.bf16.msra.mxu0 0
        %310 = vmatprep.subr.bf16.mxu0 0
        %311 = vmatpush1.bf16.msra.mxu0 0
        %312 = vmatprep.subr.bf16.mxu0 0
        %313 = vmatpush1.bf16.msra.mxu0 0
        %314 = vmatprep.subr.bf16.mxu0 0
        %315 = vmatpush1.bf16.msra.mxu0 0
        %316 = vmatprep.mubr.bf16.mxu0 0
        %317 = vmatmul.mubr.bf16.gmra.mrb[0].mxu0 %v278
        %v318 = vpop.f32.mrb[0].mxu0
        %v319 = vadd.f32 0.0, %v318
        %v320 = vpop.f32.mrb[0].mxu0
        %v321 = vpop.f32.mrb[0].mxu0
        %v322 = vpop.f32.mrb[0].mxu0
        %323 = vdwg.mxu0
        %v327 = vunpack.c.l.b16 %v239
        %v328 = vunpack.c.l.b16 %v240
        %v329 = vunpack.c.l.b16 %v241
        %v330 = vpack.c.b16 %v328, %v327
        %v331 = vpack.c.b16 %v329, %v329
        %vm333 = vcmask 171008
        %v335 = vsel %vm333, %v238, 0
        %vm337 = vcmask 1041408
        %vm338 = vcmask 1042432
        %v339 = vsel %vm337, 4294967295, 65535
        %v340 = vsel %vm338, %v339, 0
        %v342 = vand.u32 %v331, %v340
        %344 = vmatprep.subr.bf16.mxu0 0
        %345 = vmatpush1.bf16.msra.mxu0 %v330
        %346 = vmatprep.subr.bf16.mxu0 0
        %347 = vmatpush1.bf16.msra.mxu0 %v342
        %348 = vmatprep.subr.bf16.mxu0 0
        %349 = vmatpush1.bf16.msra.mxu0 0
        %350 = vmatprep.subr.bf16.mxu0 0
        %351 = vmatpush1.bf16.msra.mxu0 0
        %352 = vmatprep.subr.bf16.mxu0 0
        %353 = vmatpush1.bf16.msra.mxu0 0
        %354 = vmatprep.subr.bf16.mxu0 0
        %355 = vmatpush1.bf16.msra.mxu0 0
        %356 = vmatprep.subr.bf16.mxu0 0
        %357 = vmatpush1.bf16.msra.mxu0 0
        %358 = vmatprep.subr.bf16.mxu0 0
        %359 = vmatpush1.bf16.msra.mxu0 0
        %360 = vmatprep.subr.bf16.mxu0 0
        %361 = vmatpush1.bf16.msra.mxu0 0
        %362 = vmatprep.subr.bf16.mxu0 0
        %363 = vmatpush1.bf16.msra.mxu0 0
        %364 = vmatprep.subr.bf16.mxu0 0
        %365 = vmatpush1.bf16.msra.mxu0 0
        %366 = vmatprep.subr.bf16.mxu0 0
        %367 = vmatpush1.bf16.msra.mxu0 0
        %368 = vmatprep.subr.bf16.mxu0 0
        %369 = vmatpush1.bf16.msra.mxu0 0
        %370 = vmatprep.subr.bf16.mxu0 0
        %371 = vmatpush1.bf16.msra.mxu0 0
        %372 = vmatprep.subr.bf16.mxu0 0
        %373 = vmatpush1.bf16.msra.mxu0 0
        %374 = vmatprep.subr.bf16.mxu0 0
        %375 = vmatpush1.bf16.msra.mxu0 0
        %376 = vmatprep.mubr.bf16.mxu0 0
        %377 = vmatmul.mubr.bf16.gmra.mrb[0].mxu0 %v335
        %v378 = vpop.f32.mrb[0].mxu0
        %v379 = vadd.f32 %v319, %v378
        %v380 = vpop.f32.mrb[0].mxu0
        %v381 = vpop.f32.mrb[0].mxu0
        %v382 = vpop.f32.mrb[0].mxu0
        %383 = vdwg.mxu0
        %v384 = vld [vmem:[%s2] sm:$0xff]
        %v385 = vadd.f32 %v379, %v384
        %v386 = vpack.c.bf16 %v385, %v385
        %387 = vst [vmem:[%s228] sm:$0xf] %v386
        %s388 = sand.u32 %s142, 1
        %s389 = scalar_lea.sflag [#allocation3], %s388
        %s390 = sand.u32 %s142, 1
        %s391 = smul.addr %s390, 4
        %s392 = scalar_lea.vmem [#allocation2], %s391
        // Predicated region
        $region41: #{multitype_embedding_forward.1} parent=39 // pred_check
          %p393 = pneg %p152
        $region42: #{multitype_embedding_forward.1} parent=39 // pred_check_branch
          %395 = sbr.rel (%p393) target = $region44
        $region43: #{multitype_embedding_forward.1} parent=39 // pred_region
          %s397 = ssub.s32 64, 64
          %398 = vsyncadd %s389, %s397
          %s399 = smul.addr %s19, 64
          %s400 = scalar_lea.hbm %s5, %s399
          %s402 = sshll.u32 %s392, 4
          %s403 = int_to_ptr.vmem [resolvable:$true] %s402
          %405 = dma.vmem_to_hbm [thread:$0]  %s403, 64, %s400, %s389
        $region44: #{multitype_embedding_forward.1} parent=39 // pred_fallthru
          _
      $region40: #{multitype_embedding_forward.1} parent=5 // pred_fallthru
        _
      %p406 = scmp.le.s32.totalorder 2, %s14
      // Predicated region
      $region45: #{multitype_embedding_forward.1} parent=5 // pred_check
        %p407 = pneg %p406
      $region46: #{multitype_embedding_forward.1} parent=5 // pred_check_branch
        %409 = sbr.rel (%p407) target = $region48
      $region47: #{multitype_embedding_forward.1} parent=5 // pred_region
        %s410 = ssub.s32 %s14, 2
        // Predicated region
        $region49: #{multitype_embedding_forward.1} parent=47 // pred_check
          %p411 = pneg %p158
        $region50: #{multitype_embedding_forward.1} parent=47 // pred_check_branch
          %413 = sbr.rel (%p411) target = $region52
        $region51: #{multitype_embedding_forward.1} parent=47 // pred_region
          %s414 = sand.u32 %s143, 1
          %s415 = scalar_lea.sflag [#allocation3], %s414
          %s416 = sand.u32 %s143, 1
          %s417 = smul.addr %s416, 4
          %s418 = scalar_lea.vmem [#allocation2], %s417
          %419 = dma.done %s415, 64
        $region52: #{multitype_embedding_forward.1} parent=47 // pred_fallthru
          _
      $region48: #{multitype_embedding_forward.1} parent=5 // pred_fallthru
        _
    $region6: #{multitype_embedding_forward.1} parent=1 // loop_footer
      %s18 = sadd.s32 1, %s14
    $region7: #{multitype_embedding_forward.1} parent=1 // loop_footer_branch
      %13 = sbr.rel target = $region3
    $region8: #{multitype_embedding_forward.1} parent=1 // loop_exit
      _
    %420 = vsyncpa [#allocation3], 1
    %s421 = scalar_lea.sflag [#allocation3], 1
    %422 = vsyncpa %s421, 1

</llo_original>
